<compile_context>
chip_gen: v5e
topology: v5e:2x2
jax: 0.10.0
libtpu: 0.0.40
codegen_flags: <defaults>
</compile_context>

<pallas_src>
import jax
import jax.numpy as jnp
from jax.experimental import pallas as pl
from jax.experimental.pallas import tpu as pltpu

INPUT_SIZE = 172    # len(symptom_indexes)
NUM_CLASSES = 41    # len(disease_indexes)
HIDDEN1 = 128
HIDDEN2 = 64

MAX_BATCH_TILE = 4096    # upper bound on rows per grid step (VMEM analysis above)
SPLIT_THRESHOLD = 512    # below this, one tile; splitting only adds per-step overhead


def _cdiv(a, b):
    return -(-a // b)


def _round_up(n, m):
    return _cdiv(n, m) * m


def _mlp_kernel(x_ref, w1_ref, b1_ref, w2_ref, b2_ref, w3_ref, b3_ref, o_ref):
    """Fused 3-layer MLP on one batch tile: Linear+ReLU -> Linear+Tanh -> Linear.

    Weights are bf16 and VMEM-resident across all grid steps; matmuls run on the MXU
    with f32 accumulation; bias add / ReLU / tanh stay f32.
    """
    # In-kernel cast of the streamed x tile to bf16 (exact for 0/1 symptom indicators).
    # Going through f32 keeps this valid for any incoming dtype (f32 / int8 / bool);
    # for f32 inputs the first cast is a no-op.
    x = x_ref[...].astype(jnp.float32).astype(jnp.bfloat16)

    h1 = jnp.dot(x, w1_ref[...], preferred_element_type=jnp.float32) + b1_ref[...]
    h1 = jnp.maximum(h1, 0.0)                                      # ReLU (f32, VPU)

    h2 = jnp.dot(h1.astype(jnp.bfloat16), w2_ref[...],
                 preferred_element_type=jnp.float32) + b2_ref[...]
    h2 = jnp.tanh(h2)                                              # Tanh (f32, EUP)

    o_ref[...] = jnp.dot(h2.astype(jnp.bfloat16), w3_ref[...],
                         preferred_element_type=jnp.float32) + b3_ref[...]


def _choose_batch_tile(batch, itemsize):
    """Rows per grid step.

    Multiple of the sublane pack for the streamed x dtype, capped at MAX_BATCH_TILE;
    for large batches the tile is derived from an even tile-pair count so the
    "parallel" batch axis balances across v7x's two TensorCores.
    """
    pack = {4: 8, 2: 16, 1: 32}.get(itemsize, 8)
    if batch <= SPLIT_THRESHOLD:
        return _round_up(max(batch, 1), pack)
    pairs = max(1, _cdiv(batch, 2 * MAX_BATCH_TILE))
    return _round_up(_cdiv(batch, 2 * pairs), pack)


@jax.jit
def symptom_classifier_forward(x, w1, b1, w2, b2, w3, b3):
    """x: [B, 172] (any real dtype, 0/1 indicators) -> logits [B, 41] float32.

    Params must already be in kernel layout (see prepare_params): bf16 [in, out]
    weights and f32 [1, out] biases.
    """
    batch = x.shape[0]
    tb = _choose_batch_tile(batch, x.dtype.itemsize)
    grid = (_cdiv(batch, tb),)

    cost = pl.CostEstimate(
        flops=2 * batch * (INPUT_SIZE * HIDDEN1
                           + HIDDEN1 * HIDDEN2
                           + HIDDEN2 * NUM_CLASSES),
        transcendentals=batch * HIDDEN2,
        bytes_accessed=(batch * INPUT_SIZE * x.dtype.itemsize            # x in
                        + batch * NUM_CLASSES * 4                        # logits out
                        + (INPUT_SIZE * HIDDEN1 + HIDDEN1 * HIDDEN2
                           + HIDDEN2 * NUM_CLASSES) * 2                  # bf16 weights
                        + (HIDDEN1 + HIDDEN2 + NUM_CLASSES) * 4),        # f32 biases
    )

    return pl.pallas_call(
        _mlp_kernel,
        out_shape=jax.ShapeDtypeStruct((batch, NUM_CLASSES), jnp.float32),
        grid=grid,
        in_specs=[
            pl.BlockSpec((tb, INPUT_SIZE), lambda i: (i, 0)),        # x: streamed per tile
            pl.BlockSpec((INPUT_SIZE, HIDDEN1), lambda i: (0, 0)),   # weights/biases:
            pl.BlockSpec((1, HIDDEN1), lambda i: (0, 0)),            #   VMEM-resident
            pl.BlockSpec((HIDDEN1, HIDDEN2), lambda i: (0, 0)),
            pl.BlockSpec((1, HIDDEN2), lambda i: (0, 0)),
            pl.BlockSpec((HIDDEN2, NUM_CLASSES), lambda i: (0, 0)),
            pl.BlockSpec((1, NUM_CLASSES), lambda i: (0, 0)),
        ],
        out_specs=pl.BlockSpec((tb, NUM_CLASSES), lambda i: (i, 0)),
        compiler_params=pltpu.CompilerParams(
            dimension_semantics=("parallel",),   # v7x: shard batch tiles across both TCs
        ),
        cost_estimate=cost,
    )(x, w1, b1, w2, b2, w3, b3)


def prepare_params(w1, b1, w2, b2, w3, b3):
    """One-time conversion of f32 params ([in, out] weights, 1-D biases) into kernel
    layout: bf16 weights, f32 [1, out] biases.  Hoisted out of the jitted per-call path
    so small-batch inference does not pay six cast/reshape XLA ops per call."""
    return (
        jnp.asarray(w1, jnp.bfloat16),
        jnp.asarray(b1, jnp.float32).reshape(1, HIDDEN1),
        jnp.asarray(w2, jnp.bfloat16),
        jnp.asarray(b2, jnp.float32).reshape(1, HIDDEN2),
        jnp.asarray(w3, jnp.bfloat16),
        jnp.asarray(b3, jnp.float32).reshape(1, NUM_CLASSES),
    )


def init_params(key):
    """Deterministic init mimicking nn.Linear default (U[-1/sqrt(fan_in), +1/sqrt(fan_in)]).

    Weights are produced directly in the [in, out] layout used by the kernel; biases 1-D.
    """
    k1, k2, k3, k4, k5, k6 = jax.random.split(key, 6)

    def linear(kw, kb, fan_in, fan_out):
        bound = 1.0 / jnp.sqrt(jnp.float32(fan_in))
        w = jax.random.uniform(kw, (fan_in, fan_out), jnp.float32, -bound, bound)
        b = jax.random.uniform(kb, (fan_out,), jnp.float32, -bound, bound)
        return w, b

    w1, b1 = linear(k1, k2, INPUT_SIZE, HIDDEN1)
    w2, b2 = linear(k3, k4, HIDDEN1, HIDDEN2)
    w3, b3 = linear(k5, k6, HIDDEN2, NUM_CLASSES)
    return w1, b1, w2, b2, w3, b3


if __name__ == "__main__":
    key = jax.random.PRNGKey(0)
    k_x, k_p, k_x2 = jax.random.split(key, 3)

    raw = init_params(k_p)
    params = prepare_params(*raw)
    w1, b1, w2, b2, w3, b3 = raw

    def ref_bf16(xin):
        # Reference matching the kernel's bf16-operand / f32-accumulate math.
        h1 = jnp.maximum(jnp.dot(xin.astype(jnp.bfloat16), w1.astype(jnp.bfloat16),
                                 preferred_element_type=jnp.float32) + b1, 0.0)
        h2 = jnp.tanh(jnp.dot(h1.astype(jnp.bfloat16), w2.astype(jnp.bfloat16),
                              preferred_element_type=jnp.float32) + b2)
        return jnp.dot(h2.astype(jnp.bfloat16), w3.astype(jnp.bfloat16),
                       preferred_element_type=jnp.float32) + b3

    # Small batch (single ragged tile) — the latency-critical inference path.
    batch = 2
    x = (jax.random.uniform(k_x, (batch, INPUT_SIZE)) < 0.1).astype(jnp.float32)
    logits = jax.block_until_ready(symptom_classifier_forward(x, *params))
    assert logits.shape == (batch, NUM_CLASSES)
    assert jnp.allclose(logits, ref_bf16(x), atol=1e-2, rtol=1e-2)
    # Looser sanity check against pure-f32 module math (bf16 weight quantization only).
    ref_f32 = jnp.tanh(jnp.maximum(x @ w1 + b1, 0.0) @ w2 + b2) @ w3 + b3
    assert jnp.allclose(logits, ref_f32, atol=5e-2, rtol=5e-2)

    # Larger odd batch: exercises the multi-tile grid (2 tiles for v7x megacore) and
    # the masked ragged last tile.
    batch2 = 1000
    x2 = (jax.random.uniform(k_x2, (batch2, INPUT_SIZE)) < 0.1).astype(jnp.float32)
    logits2 = jax.block_until_ready(symptom_classifier_forward(x2, *params))
    assert logits2.shape == (batch2, NUM_CLASSES)
    assert jnp.allclose(logits2, ref_bf16(x2), atol=1e-2, rtol=1e-2)

    print("KERNEL_OK")
</pallas_src>

<mosaic_0001>
module attributes {stable_mosaic.version = 11 : i64} {
  func.func @_mlp_kernel(%arg0: i32, %arg1: memref<8x172xf32, #tpu.memory_space<vmem>>, %arg2: memref<172x128xbf16, #tpu.memory_space<vmem>>, %arg3: memref<1x128xf32, #tpu.memory_space<vmem>>, %arg4: memref<128x64xbf16, #tpu.memory_space<vmem>>, %arg5: memref<1x64xf32, #tpu.memory_space<vmem>>, %arg6: memref<64x41xbf16, #tpu.memory_space<vmem>>, %arg7: memref<1x41xf32, #tpu.memory_space<vmem>>, %arg8: memref<8x41xf32, #tpu.memory_space<vmem>>) attributes {dimension_semantics = [#tpu.dimension_semantics<parallel>], iteration_bounds = array<i64: 1>, scalar_prefetch = 0 : i64, scratch_operands = 0 : i64, tpu.core_type = #tpu.core_type<tc>, window_params = [{transform_indices = @transform_0, window_bounds = array<i64: 8, 172>}, {pipeline_mode = #tpu.pipeline_mode<synchronous>, transform_indices = @transform_1, window_bounds = array<i64: 172, 128>}, {pipeline_mode = #tpu.pipeline_mode<synchronous>, transform_indices = @transform_2, window_bounds = array<i64: 1, 128>}, {pipeline_mode = #tpu.pipeline_mode<synchronous>, transform_indices = @transform_3, window_bounds = array<i64: 128, 64>}, {pipeline_mode = #tpu.pipeline_mode<synchronous>, transform_indices = @transform_4, window_bounds = array<i64: 1, 64>}, {pipeline_mode = #tpu.pipeline_mode<synchronous>, transform_indices = @transform_5, window_bounds = array<i64: 64, 41>}, {pipeline_mode = #tpu.pipeline_mode<synchronous>, transform_indices = @transform_6, window_bounds = array<i64: 1, 41>}, {transform_indices = @transform_7, window_bounds = array<i64: 8, 41>}]} {
    %c0 = arith.constant 0 : index
    %c0_0 = arith.constant 0 : index
    %0 = vector.load %arg1[%c0, %c0_0] : memref<8x172xf32, #tpu.memory_space<vmem>>, vector<8x172xf32>
    %1 = arith.truncf %0 : vector<8x172xf32> to vector<8x172xbf16>
    %c0_1 = arith.constant 0 : index
    %c0_2 = arith.constant 0 : index
    %2 = vector.load %arg2[%c0_1, %c0_2] : memref<172x128xbf16, #tpu.memory_space<vmem>>, vector<172x128xbf16>
    %cst = arith.constant dense<0.000000e+00> : vector<8x128xf32>
    %3 = tpu.matmul %1, %2, %cst {dimension_numbers = #tpu.dot_dimension_numbers<[1], [0], [0], [1], [0, 0, 1, 1], [], []>} : vector<8x172xbf16>, vector<172x128xbf16>, vector<8x128xf32> -> vector<8x128xf32>
    %c0_3 = arith.constant 0 : index
    %c0_4 = arith.constant 0 : index
    %4 = vector.load %arg3[%c0_3, %c0_4] : memref<1x128xf32, #tpu.memory_space<vmem>>, vector<1x128xf32>
    %5 = vector.broadcast %4 : vector<1x128xf32> to vector<8x128xf32>
    %6 = arith.addf %3, %5 : vector<8x128xf32>
    %cst_5 = arith.constant 0.000000e+00 : f32
    %7 = vector.broadcast %cst_5 : f32 to vector<8x128xf32>
    %8 = arith.maximumf %6, %7 : vector<8x128xf32>
    %9 = arith.truncf %8 : vector<8x128xf32> to vector<8x128xbf16>
    %c0_6 = arith.constant 0 : index
    %c0_7 = arith.constant 0 : index
    %10 = vector.load %arg4[%c0_6, %c0_7] : memref<128x64xbf16, #tpu.memory_space<vmem>>, vector<128x64xbf16>
    %cst_8 = arith.constant dense<0.000000e+00> : vector<8x64xf32>
    %11 = tpu.matmul %9, %10, %cst_8 {dimension_numbers = #tpu.dot_dimension_numbers<[1], [0], [0], [1], [0, 0, 1, 1], [], []>} : vector<8x128xbf16>, vector<128x64xbf16>, vector<8x64xf32> -> vector<8x64xf32>
    %c0_9 = arith.constant 0 : index
    %c0_10 = arith.constant 0 : index
    %12 = vector.load %arg5[%c0_9, %c0_10] : memref<1x64xf32, #tpu.memory_space<vmem>>, vector<1x64xf32>
    %13 = vector.broadcast %12 : vector<1x64xf32> to vector<8x64xf32>
    %14 = arith.addf %11, %13 : vector<8x64xf32>
    %15 = math.tanh %14 : vector<8x64xf32>
    %16 = arith.truncf %15 : vector<8x64xf32> to vector<8x64xbf16>
    %c0_11 = arith.constant 0 : index
    %c0_12 = arith.constant 0 : index
    %17 = vector.load %arg6[%c0_11, %c0_12] : memref<64x41xbf16, #tpu.memory_space<vmem>>, vector<64x41xbf16>
    %cst_13 = arith.constant dense<0.000000e+00> : vector<8x41xf32>
    %18 = tpu.matmul %16, %17, %cst_13 {dimension_numbers = #tpu.dot_dimension_numbers<[1], [0], [0], [1], [0, 0, 1, 1], [], []>} : vector<8x64xbf16>, vector<64x41xbf16>, vector<8x41xf32> -> vector<8x41xf32>
    %c0_14 = arith.constant 0 : index
    %c0_15 = arith.constant 0 : index
    %19 = vector.load %arg7[%c0_14, %c0_15] : memref<1x41xf32, #tpu.memory_space<vmem>>, vector<1x41xf32>
    %20 = vector.broadcast %19 : vector<1x41xf32> to vector<8x41xf32>
    %21 = arith.addf %18, %20 : vector<8x41xf32>
    %c0_16 = arith.constant 0 : index
    %c0_17 = arith.constant 0 : index
    %22 = vector.load %arg8[%c0_16, %c0_17] : memref<8x41xf32, #tpu.memory_space<vmem>>, vector<8x41xf32>
    tpu.vector_store %arg8[%c0_16, %c0_17], %21 {strides = array<i32>} : memref<8x41xf32, #tpu.memory_space<vmem>>, vector<8x41xf32>,
    return
  }
  func.func @transform_0(%arg0: i32) -> (i32, i32) {
    %c0_i32 = arith.constant 0 : i32
    %c0_i32_0 = arith.constant 0 : i32
    return %arg0, %c0_i32 : i32, i32
  }
  func.func @transform_1(%arg0: i32) -> (i32, i32) {
    %c0_i32 = arith.constant 0 : i32
    %c0_i32_0 = arith.constant 0 : i32
    %c0_i32_1 = arith.constant 0 : i32
    return %c0_i32, %c0_i32_0 : i32, i32
  }
  func.func @transform_2(%arg0: i32) -> (i32, i32) {
    %c0_i32 = arith.constant 0 : i32
    %c0_i32_0 = arith.constant 0 : i32
    %c0_i32_1 = arith.constant 0 : i32
    return %c0_i32, %c0_i32_0 : i32, i32
  }
  func.func @transform_3(%arg0: i32) -> (i32, i32) {
    %c0_i32 = arith.constant 0 : i32
    %c0_i32_0 = arith.constant 0 : i32
    %c0_i32_1 = arith.constant 0 : i32
    return %c0_i32, %c0_i32_0 : i32, i32
  }
  func.func @transform_4(%arg0: i32) -> (i32, i32) {
    %c0_i32 = arith.constant 0 : i32
    %c0_i32_0 = arith.constant 0 : i32
    %c0_i32_1 = arith.constant 0 : i32
    return %c0_i32, %c0_i32_0 : i32, i32
  }
  func.func @transform_5(%arg0: i32) -> (i32, i32) {
    %c0_i32 = arith.constant 0 : i32
    %c0_i32_0 = arith.constant 0 : i32
    %c0_i32_1 = arith.constant 0 : i32
    return %c0_i32, %c0_i32_0 : i32, i32
  }
  func.func @transform_6(%arg0: i32) -> (i32, i32) {
    %c0_i32 = arith.constant 0 : i32
    %c0_i32_0 = arith.constant 0 : i32
    %c0_i32_1 = arith.constant 0 : i32
    return %c0_i32, %c0_i32_0 : i32, i32
  }
  func.func @transform_7(%arg0: i32) -> (i32, i32) {
    %c0_i32 = arith.constant 0 : i32
    %c0_i32_0 = arith.constant 0 : i32
    return %arg0, %c0_i32 : i32, i32
  }
}

</mosaic_0001>

<llo_original>
// kernel: symptom_classifier_forward.1
$region0: #{symptom_classifier_forward.1}
  #allocation0 [shape = 'u32[]', space=smem, size = 0x4, offset = 0x4, fixed_abs, tag = 'smem constant byte address 0x4 - core index']
  #allocation1 [shape = 'u32[72,128]{1,0:T(1,128)}', space=vmem, size = 0x9000, scoped, tag = 'internal scratch']
  %s0 = inlined_call_operand.vmem [shape: f32[2,172], index: 0, kind: input, shape index: {}]
  %s1 = inlined_call_operand.vmem [shape: bf16[172,128], index: 1, kind: input, shape index: {}]
  %s2 = inlined_call_operand.vmem [shape: f32[1,128], index: 2, kind: input, shape index: {}]
  %s3 = inlined_call_operand.vmem [shape: bf16[128,64], index: 3, kind: input, shape index: {}]
  %s4 = inlined_call_operand.vmem [shape: f32[1,64], index: 4, kind: input, shape index: {}]
  %s5 = inlined_call_operand.vmem [shape: bf16[64,41], index: 5, kind: input, shape index: {}]
  %s6 = inlined_call_operand.vmem [shape: f32[1,41], index: 6, kind: input, shape index: {}]
  %s7 = inlined_call_operand.hbm [shape: f32[2,41], index: 7, kind: output, shape index: {}]
  %s8 = sld [smem:[#allocation0]]
  $region38: #{symptom_classifier_forward.1} parent=0
    _
  %s10 = ssub.s32 1, %s8
  %s11 = scalar_select 0, %s10, %s8
  $region1: #{symptom_classifier_forward.1} parent=0
    #allocation2 [shape = 'u8[4096]{0}', space=vmem, size = 0x1000, scoped, tag = 'output window, operand 0, single buffered']
    #allocation3 [shape = 's32[1]{0}', space=sflag, size = 0x4, scoped, tag = 'scoped memory for symptom_classifier_forward.1']
    %12 = vsyncpa [#allocation3], 0
    // Predicated region
    $region2: #{symptom_classifier_forward.1} parent=1 // pred_check
      _
    $region3: #{symptom_classifier_forward.1} parent=1 // pred_check_branch
      %14 = sbr.rel (0) target = $region5
    $region4: #{symptom_classifier_forward.1} parent=1 // pred_region
      _
    $region5: #{symptom_classifier_forward.1} parent=1 // pred_fallthru
      _
    // Predicated region
    $region6: #{symptom_classifier_forward.1} parent=1 // pred_check
      _
    $region7: #{symptom_classifier_forward.1} parent=1 // pred_check_branch
      %16 = sbr.rel (0) target = $region9
    $region8: #{symptom_classifier_forward.1} parent=1 // pred_region
      _
    $region9: #{symptom_classifier_forward.1} parent=1 // pred_fallthru
      _
    // Predicated region
    $region10: #{symptom_classifier_forward.1} parent=1 // pred_check
      _
    $region11: #{symptom_classifier_forward.1} parent=1 // pred_check_branch
      %18 = sbr.rel (0) target = $region13
    $region12: #{symptom_classifier_forward.1} parent=1 // pred_region
      _
    $region13: #{symptom_classifier_forward.1} parent=1 // pred_fallthru
      _
    // Predicated region
    $region14: #{symptom_classifier_forward.1} parent=1 // pred_check
      _
    $region15: #{symptom_classifier_forward.1} parent=1 // pred_check_branch
      %20 = sbr.rel (0) target = $region17
    $region16: #{symptom_classifier_forward.1} parent=1 // pred_region
      _
    $region17: #{symptom_classifier_forward.1} parent=1 // pred_fallthru
      _
    // Predicated region
    $region18: #{symptom_classifier_forward.1} parent=1 // pred_check
      _
    $region19: #{symptom_classifier_forward.1} parent=1 // pred_check_branch
      %22 = sbr.rel (0) target = $region21
    $region20: #{symptom_classifier_forward.1} parent=1 // pred_region
      _
    $region21: #{symptom_classifier_forward.1} parent=1 // pred_fallthru
      _
    // Predicated region
    $region22: #{symptom_classifier_forward.1} parent=1 // pred_check
      _
    $region23: #{symptom_classifier_forward.1} parent=1 // pred_check_branch
      %24 = sbr.rel (0) target = $region25
    $region24: #{symptom_classifier_forward.1} parent=1 // pred_region
      _
    $region25: #{symptom_classifier_forward.1} parent=1 // pred_fallthru
      _
    // Predicated region
    $region26: #{symptom_classifier_forward.1} parent=1 // pred_check
      _
    $region27: #{symptom_classifier_forward.1} parent=1 // pred_check_branch
      %26 = sbr.rel (0) target = $region29
    $region28: #{symptom_classifier_forward.1} parent=1 // pred_region
      _
    $region29: #{symptom_classifier_forward.1} parent=1 // pred_fallthru
      _
    %v28 = vld [vmem:[%s0] sm:$0xf]
    %v29 = vld [vmem:[%s0 + $0x4] sm:$0xf]
    %v30 = vld [vmem:[%s0 + $0x8] sm:$0xf]
    %v31 = vld [vmem:[%s0 + $0xc] sm:$0xf]
    %36 = vst [vmem:[#allocation1] ss:$4 sm:$0xff] %v28
    %s37 = scalar_lea.vmem [#allocation1], 1
    %38 = vst [vmem:[%s37] ss:$4 sm:$0xff] %v29
    %s39 = scalar_lea.vmem [#allocation1], 2
    %40 = vst [vmem:[%s39] ss:$4 sm:$0xff] %v30
    %s41 = scalar_lea.vmem [#allocation1], 3
    %42 = vst [vmem:[%s41] ss:$4 sm:$0xff] %v31
    %v43 = vld.sshfl [vmem:[#allocation1] sm:$0xff pattern:$0x73625140]
    %v44 = vld.sshfl [vmem:[#allocation1 + $0x8] sm:$0xff pattern:$0x73625140]
    %v47 = vpack.c.bf16 %v43, %v43
    %v48 = vpack.c.bf16 %v44, %v44
    %v49 = vld [vmem:[%s1] sm:$0xf]
    %v50 = vld [vmem:[%s1 + $0x4] sm:$0xf]
    %v51 = vld [vmem:[%s1 + $0x8] sm:$0xf]
    %v52 = vld [vmem:[%s1 + $0xc] sm:$0xf]
    %v53 = vld [vmem:[%s1 + $0x10] sm:$0xf]
    %v54 = vld [vmem:[%s1 + $0x14] sm:$0xf]
    %v55 = vld [vmem:[%s1 + $0x18] sm:$0xf]
    %v56 = vld [vmem:[%s1 + $0x1c] sm:$0xf]
    %v57 = vld [vmem:[%s1 + $0x20] sm:$0xf]
    %v58 = vld [vmem:[%s1 + $0x24] sm:$0xf]
    %v59 = vld [vmem:[%s1 + $0x28] sm:$0xf]
    %v60 = vld [vmem:[%s1 + $0x2c] sm:$0xf]
    %v61 = vld [vmem:[%s1 + $0x30] sm:$0xf]
    %v62 = vld [vmem:[%s1 + $0x34] sm:$0xf]
    %v63 = vld [vmem:[%s1 + $0x38] sm:$0xf]
    %v64 = vld [vmem:[%s1 + $0x3c] sm:$0xf]
    %v65 = vld [vmem:[%s1 + $0x40] sm:$0xf]
    %v66 = vld [vmem:[%s1 + $0x44] sm:$0xf]
    %v67 = vld [vmem:[%s1 + $0x48] sm:$0xf]
    %v68 = vld [vmem:[%s1 + $0x4c] sm:$0xf]
    %v69 = vld [vmem:[%s1 + $0x50] sm:$0xf]
    %v70 = vld [vmem:[%s1 + $0x54] sm:$0x3]
    %v71 = vld [vmem:[%s2] sm:$0x1]
    %v73 = vperm.slane %v71, 0
    %v97 = vunpack.c.l.b16 %v49
    %v98 = vunpack.c.l.b16 %v50
    %v99 = vunpack.c.l.b16 %v51
    %v100 = vunpack.c.l.b16 %v52
    %v101 = vunpack.c.l.b16 %v53
    %v102 = vunpack.c.l.b16 %v54
    %v103 = vunpack.c.l.b16 %v55
    %v104 = vunpack.c.l.b16 %v56
    %v105 = vunpack.c.l.b16 %v57
    %v106 = vunpack.c.l.b16 %v58
    %v107 = vunpack.c.l.b16 %v59
    %v108 = vunpack.c.l.b16 %v60
    %v109 = vunpack.c.l.b16 %v61
    %v110 = vunpack.c.l.b16 %v62
    %v111 = vunpack.c.l.b16 %v63
    %v112 = vunpack.c.l.b16 %v64
    %v113 = vunpack.c.l.b16 %v65
    %v114 = vunpack.c.l.b16 %v66
    %v115 = vunpack.c.l.b16 %v67
    %v116 = vunpack.c.l.b16 %v68
    %v117 = vunpack.c.l.b16 %v69
    %v118 = vunpack.c.l.b16 %v70
    %v119 = vpack.c.b16 %v98, %v97
    %v120 = vpack.c.b16 %v100, %v99
    %v121 = vpack.c.b16 %v102, %v101
    %v122 = vpack.c.b16 %v104, %v103
    %v123 = vpack.c.b16 %v106, %v105
    %v124 = vpack.c.b16 %v108, %v107
    %v125 = vpack.c.b16 %v110, %v109
    %v126 = vpack.c.b16 %v112, %v111
    %v127 = vpack.c.b16 %v114, %v113
    %v128 = vpack.c.b16 %v116, %v115
    %v129 = vpack.c.b16 %v118, %v117
    %vm140 = vcmask 359424
    %v142 = vsel %vm140, %v48, 0
    %vm144 = vcmask 1045504
    %v146 = vsel %vm144, %v129, 0
    %148 = vmatpush.bf16.msra.mxu0 %v126
    %149 = vmatpush.bf16.msra.mxu0 %v125
    %150 = vmatpush.bf16.msra.mxu0 %v124
    %151 = vmatpush.bf16.msra.mxu0 %v123
    %152 = vmatpush.bf16.msra.mxu0 %v122
    %153 = vmatpush.bf16.msra.mxu0 %v121
    %154 = vmatpush.bf16.msra.mxu0 %v120
    %155 = vmatpush.bf16.msra.mxu0 %v119
    %156 = vmatmul.bf16.gmra.mxu0 %v47
    %v157 = vpop.f32.mrf.mxu0
    %v158 = vadd.f32 %v73, %v157
    %v159 = vpop.f32.mrf.mxu0
    %160 = vdwg.mxu0
    %161 = vmatpush.bf16.msra.mxu0 0
    %162 = vmatpush.bf16.msra.mxu0 0
    %163 = vmatpush.bf16.msra.mxu0 0
    %164 = vmatpush.bf16.msra.mxu0 0
    %165 = vmatpush.bf16.msra.mxu0 0
    %166 = vmatpush.bf16.msra.mxu0 %v146
    %167 = vmatpush.bf16.msra.mxu0 %v128
    %168 = vmatpush.bf16.msra.mxu0 %v127
    %169 = vmatmul.bf16.gmra.mxu0 %v142
    %v170 = vpop.f32.mrf.mxu0
    %v171 = vadd.f32 %v158, %v170
    %v172 = vpop.f32.mrf.mxu0
    %173 = vdwg.mxu0
    %v174 = vmax.f32 %v171, 0.0
    %v175 = vpack.c.bf16 %v174, %v174
    %v176 = vld [vmem:[%s3] sm:$0xf]
    %v177 = vld [vmem:[%s3 + $0x4] sm:$0xf]
    %v178 = vld [vmem:[%s3 + $0x8] sm:$0xf]
    %v179 = vld [vmem:[%s3 + $0xc] sm:$0xf]
    %v180 = vld [vmem:[%s3 + $0x10] sm:$0xf]
    %v181 = vld [vmem:[%s3 + $0x14] sm:$0xf]
    %v182 = vld [vmem:[%s3 + $0x18] sm:$0xf]
    %v183 = vld [vmem:[%s3 + $0x1c] sm:$0xf]
    %v184 = vld [vmem:[%s3 + $0x20] sm:$0xf]
    %v185 = vld [vmem:[%s3 + $0x24] sm:$0xf]
    %v186 = vld [vmem:[%s3 + $0x28] sm:$0xf]
    %v187 = vld [vmem:[%s3 + $0x2c] sm:$0xf]
    %v188 = vld [vmem:[%s3 + $0x30] sm:$0xf]
    %v189 = vld [vmem:[%s3 + $0x34] sm:$0xf]
    %v190 = vld [vmem:[%s3 + $0x38] sm:$0xf]
    %v191 = vld [vmem:[%s3 + $0x3c] sm:$0xf]
    %v192 = vld [vmem:[%s4] sm:$0x1]
    %v194 = vperm.slane %v192, 0
    %v212 = vunpack.c.l.b16 %v176
    %v213 = vunpack.c.l.b16 %v177
    %v214 = vunpack.c.l.b16 %v178
    %v215 = vunpack.c.l.b16 %v179
    %v216 = vunpack.c.l.b16 %v180
    %v217 = vunpack.c.l.b16 %v181
    %v218 = vunpack.c.l.b16 %v182
    %v219 = vunpack.c.l.b16 %v183
    %v220 = vunpack.c.l.b16 %v184
    %v221 = vunpack.c.l.b16 %v185
    %v222 = vunpack.c.l.b16 %v186
    %v223 = vunpack.c.l.b16 %v187
    %v224 = vunpack.c.l.b16 %v188
    %v225 = vunpack.c.l.b16 %v189
    %v226 = vunpack.c.l.b16 %v190
    %v227 = vunpack.c.l.b16 %v191
    %v228 = vpack.c.b16 %v213, %v212
    %v229 = vpack.c.b16 %v215, %v214
    %v230 = vpack.c.b16 %v217, %v216
    %v231 = vpack.c.b16 %v219, %v218
    %v232 = vpack.c.b16 %v221, %v220
    %v233 = vpack.c.b16 %v223, %v222
    %v234 = vpack.c.b16 %v225, %v224
    %v235 = vpack.c.b16 %v227, %v226
    %244 = vmatpush.bf16.msra.mxu0 %v235
    %245 = vmatpush.bf16.msra.mxu0 %v234
    %246 = vmatpush.bf16.msra.mxu0 %v233
    %247 = vmatpush.bf16.msra.mxu0 %v232
    %248 = vmatpush.bf16.msra.mxu0 %v231
    %249 = vmatpush.bf16.msra.mxu0 %v230
    %250 = vmatpush.bf16.msra.mxu0 %v229
    %251 = vmatpush.bf16.msra.mxu0 %v228
    %252 = vmatmul.bf16.gmra.mxu0 %v175
    %v253 = vpop.f32.mrf.mxu0
    %v254 = vadd.f32 %v194, %v253
    %v255 = vpop.f32.mrf.mxu0
    %256 = vdwg.mxu0
    %v257 = vtanh.pop %v254
    %v258 = vpack.c.bf16 %v257, %v257
    %v259 = vld [vmem:[%s5] sm:$0xf]
    %v260 = vld [vmem:[%s5 + $0x4] sm:$0xf]
    %v261 = vld [vmem:[%s5 + $0x8] sm:$0xf]
    %v262 = vld [vmem:[%s5 + $0xc] sm:$0xf]
    %v263 = vld [vmem:[%s5 + $0x10] sm:$0xf]
    %v264 = vld [vmem:[%s5 + $0x14] sm:$0xf]
    %v265 = vld [vmem:[%s5 + $0x18] sm:$0xf]
    %v266 = vld [vmem:[%s5 + $0x1c] sm:$0xf]
    %v267 = vld [vmem:[%s6] sm:$0x1]
    %v269 = vperm.slane %v267, 0
    %v279 = vunpack.c.l.b16 %v259
    %v280 = vunpack.c.l.b16 %v260
    %v281 = vunpack.c.l.b16 %v261
    %v282 = vunpack.c.l.b16 %v262
    %v283 = vunpack.c.l.b16 %v263
    %v284 = vunpack.c.l.b16 %v264
    %v285 = vunpack.c.l.b16 %v265
    %v286 = vunpack.c.l.b16 %v266
    %v287 = vpack.c.b16 %v280, %v279
    %v288 = vpack.c.b16 %v282, %v281
    %v289 = vpack.c.b16 %v284, %v283
    %v290 = vpack.c.b16 %v286, %v285
    %vm295 = vcmask 523264
    %v297 = vsel %vm295, %v258, 0
    %299 = vmatpush.bf16.msra.mxu0 0
    %300 = vmatpush.bf16.msra.mxu0 0
    %301 = vmatpush.bf16.msra.mxu0 0
    %302 = vmatpush.bf16.msra.mxu0 0
    %303 = vmatpush.bf16.msra.mxu0 %v290
    %304 = vmatpush.bf16.msra.mxu0 %v289
    %305 = vmatpush.bf16.msra.mxu0 %v288
    %306 = vmatpush.bf16.msra.mxu0 %v287
    %307 = vmatmul.bf16.gmra.mxu0 %v297
    %v308 = vpop.f32.mrf.mxu0
    %v309 = vadd.f32 %v269, %v308
    %v310 = vpop.f32.mrf.mxu0
    %311 = vdwg.mxu0
    %vm312 = vcmask 334848
    %313 = vst.msk [vmem:[#allocation2] sm:$0xff] %vm312, %v309
    // Predicated region
    $region30: #{symptom_classifier_forward.1} parent=1 // pred_check
      _
    $region31: #{symptom_classifier_forward.1} parent=1 // pred_check_branch
      %315 = sbr.rel (0) target = $region33
    $region32: #{symptom_classifier_forward.1} parent=1 // pred_region
      %317 = vsyncadd [#allocation3], 96
      %s318 = sshll.u32 [#allocation2], 4
      %s319 = int_to_ptr.vmem [resolvable:$true] %s318
      %s320 = sshll.u32 %s7, 4
      %s321 = int_to_ptr.hbm [resolvable:$true] %s320
      %326 = dma.vmem_to_hbm [thread:$0]  %s319, 32, %s321, [#allocation3], 32, 32, 2
    $region33: #{symptom_classifier_forward.1} parent=1 // pred_fallthru
      _
    // Predicated region
    $region34: #{symptom_classifier_forward.1} parent=1 // pred_check
      _
    $region35: #{symptom_classifier_forward.1} parent=1 // pred_check_branch
      %328 = sbr.rel (0) target = $region37
    $region36: #{symptom_classifier_forward.1} parent=1 // pred_region
      %330 = dma.done [#allocation3], 128
    $region37: #{symptom_classifier_forward.1} parent=1 // pred_fallthru
      _
    %331 = vsyncpa [#allocation3], 1

</llo_original>
